<compile_context>
chip_gen: v6e
topology: v6e:2x2x1
jax: 0.10.0
libtpu: 0.0.40
codegen_flags: <defaults>
</compile_context>

<pallas_src>
import functools

import jax
import jax.numpy as jnp
from jax import lax
from jax.experimental import pallas as pl
from jax.experimental.pallas import tpu as pltpu


# --------------------------------------------------------------------------
# Shared semaphore-ring row-DMA loop.
# `make_copy(g)` must deterministically rebuild the descriptor for row g
# (start and wait then agree on size + semaphore slot).
# --------------------------------------------------------------------------
def _ring_row_dma_loop(rows_here, ring, make_copy):
    def _main(g, carry):
        @pl.when(g >= ring)
        def _():
            make_copy(g - ring).wait()      # free the slot we are about to reuse
        make_copy(g).start()
        return carry

    lax.fori_loop(0, rows_here, _main, 0)

    def _drain(g, carry):
        make_copy(g).wait()
        return carry

    lax.fori_loop(jnp.maximum(rows_here - ring, 0), rows_here, _drain, 0)


# ------------------------------- pull: gather ------------------------------
def _gather_kernel(n_id_ref, emb_hbm, out_hbm, sem, *, rows_per_step, ring):
    """out[row] = emb[n_id[row]] via direct HBM->HBM row DMAs."""
    num_rows = n_id_ref.shape[0]                      # static batch size
    base = pl.program_id(0) * rows_per_step
    rows_here = jnp.minimum(num_rows - base, rows_per_step)   # masks the tail

    def make_copy(g):
        row = base + g
        return pltpu.make_async_copy(
            emb_hbm.at[pl.ds(n_id_ref[row], 1), :],
            out_hbm.at[pl.ds(row, 1), :],
            sem.at[g % ring],
        )

    _ring_row_dma_loop(rows_here, ring, make_copy)


def _pull_impl(n_id, emb, *, rows_per_step, ring):
    N, D = emb.shape
    B = n_id.shape[0]
    kernel = functools.partial(_gather_kernel, rows_per_step=rows_per_step, ring=ring)
    return pl.pallas_call(
        kernel,
        out_shape=jax.ShapeDtypeStruct((B, D), emb.dtype),
        grid_spec=pltpu.PrefetchScalarGridSpec(
            num_scalar_prefetch=1,                      # n_id -> SMEM
            grid=(pl.cdiv(B, rows_per_step),),
            in_specs=[pl.BlockSpec(memory_space=pl.ANY)],   # emb stays in HBM
            out_specs=pl.BlockSpec(memory_space=pl.ANY),    # out written by DMA only
            scratch_shapes=[pltpu.SemaphoreType.DMA((ring,))],
        ),
        compiler_params=pltpu.CompilerParams(
            dimension_semantics=("parallel",)),         # rows independent (2 TCs on v7x)
    )(n_id, emb)


_pull_jit = jax.jit(_pull_impl, static_argnames=("rows_per_step", "ring"))


def history_pull(emb, n_id=None, *, rows_per_step=512, ring=32):
    """emb: [N, D]; n_id: [B] int or None. Returns emb or emb[n_id]."""
    if n_id is None:
        return emb
    N, D = emb.shape
    n_id = jnp.asarray(n_id, dtype=jnp.int32)
    if int(n_id.shape[0]) == 0:
        return jnp.zeros((0, D), emb.dtype)
    ring = max(1, min(ring, rows_per_step))
    return _pull_jit(n_id, emb, rows_per_step=rows_per_step, ring=ring)


# ------------------------------- push: scatter -----------------------------
def _scatter_kernel(n_id_ref, x_hbm, emb_in_hbm, out_hbm, sem, *, rows_per_step, ring):
    """emb[n_id[row]] = x[row] via direct HBM->HBM row DMAs (emb aliased)."""
    del emb_in_hbm                                     # aliased with out_hbm
    num_rows = n_id_ref.shape[0]
    base = pl.program_id(0) * rows_per_step
    rows_here = jnp.minimum(num_rows - base, rows_per_step)

    def make_copy(g):
        row = base + g
        return pltpu.make_async_copy(
            x_hbm.at[pl.ds(row, 1), :],
            out_hbm.at[pl.ds(n_id_ref[row], 1), :],
            sem.at[g % ring],
        )

    _ring_row_dma_loop(rows_here, ring, make_copy)


def _scatter_push_impl(emb, x, n_id, *, rows_per_step, ring, unique_indices):
    N, D = emb.shape
    B = n_id.shape[0]
    x = x.astype(emb.dtype)
    kernel = functools.partial(_scatter_kernel, rows_per_step=rows_per_step, ring=ring)
    return pl.pallas_call(
        kernel,
        out_shape=jax.ShapeDtypeStruct((N, D), emb.dtype),
        grid_spec=pltpu.PrefetchScalarGridSpec(
            num_scalar_prefetch=1,                      # n_id -> SMEM
            grid=(pl.cdiv(B, rows_per_step),),
            in_specs=[pl.BlockSpec(memory_space=pl.ANY),    # x rows (HBM)
                      pl.BlockSpec(memory_space=pl.ANY)],   # emb table (HBM)
            out_specs=pl.BlockSpec(memory_space=pl.ANY),    # same buffer (aliased)
            scratch_shapes=[pltpu.SemaphoreType.DMA((ring,))],
        ),
        # inputs are (n_id, x, emb): alias counts the scalar-prefetch operand,
        # so emb is input index 2 -> output 0 (a wrong index would fail the
        # shape/dtype alias check at trace time, so no silent mis-alias).
        input_output_aliases={2: 0},
        # "arbitrary": sequential grid -> last-write-wins across row groups for
        # duplicate n_id (duplicates inside one `ring` window race, matching
        # torch's unspecified scatter-with-duplicates behaviour).
        # unique_indices=True: shard across both v7x TensorCores.
        compiler_params=pltpu.CompilerParams(
            dimension_semantics=("parallel",) if unique_indices else ("arbitrary",)),
    )(n_id, x, emb)


# donate emb so input_output_aliases really is in place (no full-table copy)
_scatter_push = jax.jit(_scatter_push_impl, donate_argnums=(0,),
                        static_argnames=("rows_per_step", "ring", "unique_indices"))


# --------------------- push: contiguous offset/count segments --------------
def _segment_copy_kernel(x_hbm, emb_in_hbm, out_hbm, sem, *, segments, ring):
    """One (count_i, D) HBM->HBM DMA per contiguous segment (static offsets)."""
    del emb_in_hbm                                     # aliased with out_hbm
    n = len(segments)

    def make_copy(i):
        src, dst, cnt = segments[i]
        return pltpu.make_async_copy(
            x_hbm.at[pl.ds(src, cnt), :],
            out_hbm.at[pl.ds(dst, cnt), :],
            sem.at[i % ring],
        )

    for i in range(n):
        if i >= ring:
            make_copy(i - ring).wait()
        make_copy(i).start()
    for i in range(max(0, n - ring), n):
        make_copy(i).wait()


def _segment_push_impl(emb, x, *, segments, ring):
    N, D = emb.shape
    x = x.astype(emb.dtype)
    kernel = functools.partial(_segment_copy_kernel, segments=segments, ring=ring)
    return pl.pallas_call(
        kernel,
        out_shape=jax.ShapeDtypeStruct((N, D), emb.dtype),
        in_specs=[pl.BlockSpec(memory_space=pl.ANY),       # x (HBM)
                  pl.BlockSpec(memory_space=pl.ANY)],      # emb table (HBM)
        out_specs=pl.BlockSpec(memory_space=pl.ANY),       # aliased emb
        scratch_shapes=[pltpu.SemaphoreType.DMA((ring,))],
        input_output_aliases={1: 0},                       # emb -> out, in place
    )(x, emb)


_segment_push = jax.jit(_segment_push_impl, donate_argnums=(0,),
                        static_argnames=("segments", "ring"))


def history_push(emb, x, n_id=None, offset=None, count=None, *,
                 rows_per_step=512, ring=32, unique_indices=False):
    """Functional version of History.push: returns the updated emb table."""
    N, D = emb.shape
    x = jnp.asarray(x)
    if n_id is None and offset is None and count is None:
        if x.shape[0] != N:
            raise ValueError
        # torch's emb.copy_(x): full-table overwrite.  Owned copy so a later
        # donated push can never invalidate the caller's array.
        return jnp.array(x, dtype=emb.dtype)

    if offset is not None and count is not None:
        # offset/count are host integers in the reference (`.tolist()`).
        # Source rows are contiguous from 0; copy each contiguous segment with
        # ONE (count_i, D) DMA instead of per-row copies.
        offs = [int(o) for o in offset]
        cnts = [int(c) for c in count]
        segments, src = [], 0
        for o, c in zip(offs, cnts):
            if c > 0:
                segments.append((src, o, c))
            src += c
        if not segments:
            return emb
        seg_ring = max(1, min(8, len(segments)))
        return _segment_push(emb, x, segments=tuple(segments), ring=seg_ring)

    n_id = jnp.asarray(n_id, dtype=jnp.int32)
    if int(n_id.shape[0]) == 0:
        return emb
    ring = max(1, min(ring, rows_per_step))
    return _scatter_push(emb, x, n_id, rows_per_step=rows_per_step, ring=ring,
                         unique_indices=unique_indices)


# --------------------------- module-like wrapper ----------------------------
class History:
    """JAX/Pallas port of torch_geometric_autoscale.History (functional emb)."""

    def __init__(self, num_embeddings: int, embedding_dim: int):
        self.num_embeddings = num_embeddings
        self.embedding_dim = embedding_dim
        self.reset_parameters()

    def reset_parameters(self):
        # torch.empty(...).fill_(0) -> zeros, float32
        self.emb = jnp.zeros((self.num_embeddings, self.embedding_dim),
                             dtype=jnp.float32)

    def pull(self, n_id=None):
        return history_pull(self.emb, n_id)

    def push(self, x, n_id=None, offset=None, count=None, **kwargs):
        self.emb = history_push(self.emb, x, n_id, offset, count, **kwargs)

    def forward(self, *args, **kwargs):
        raise NotImplementedError

    def __repr__(self):
        return f"History({self.num_embeddings}, {self.embedding_dim})"


if __name__ == "__main__":
    key = jax.random.PRNGKey(0)
    num_embeddings, embedding_dim, batch = 64, 128, 16

    hist = History(num_embeddings, embedding_dim)
    k1, k2, k3 = jax.random.split(key, 3)

    # 1) full-table push (n_id is None, x.size(0) == num_embeddings)
    full = jax.random.normal(k1, (num_embeddings, embedding_dim), jnp.float32)
    hist.push(full)

    # 2) scatter push with n_id (aliased, in-place row DMAs)
    n_id = jax.random.permutation(k2, num_embeddings)[:batch].astype(jnp.int32)
    x = jax.random.normal(k3, (batch, embedding_dim), jnp.float32)
    hist.push(x, n_id=n_id)

    # 3) gather pull with n_id (HBM->HBM row-DMA gather)
    out = jax.block_until_ready(hist.pull(n_id))

    ref_emb = full.at[n_id].set(x)
    assert out.shape == (batch, embedding_dim)
    assert jnp.allclose(hist.emb, ref_emb, atol=1e-6)
    assert jnp.allclose(out, ref_emb[n_id], atol=1e-6)

    # 4) push with offset/count (one DMA per contiguous segment)
    hist.push(x[:8], offset=[0, 32], count=[4, 4])
    ref_emb = ref_emb.at[0:4].set(x[0:4]).at[32:36].set(x[4:8])
    assert jnp.allclose(jax.block_until_ready(hist.emb), ref_emb, atol=1e-6)

    # 5) full pull
    assert jnp.allclose(hist.pull(), ref_emb, atol=1e-6)

    # 6) gather with a batch that is not a multiple of the row group
    small_ids = n_id[:5]
    small = jax.block_until_ready(hist.pull(small_ids))
    assert small.shape == (5, embedding_dim)
    assert jnp.allclose(small, ref_emb[small_ids], atol=1e-6)

    # 7) unique-index scatter push exercising the "parallel" (2-TC on v7x) path
    emb2 = history_push(jnp.zeros((num_embeddings, embedding_dim), jnp.float32),
                        x, n_id=n_id, unique_indices=True)
    ref2 = jnp.zeros((num_embeddings, embedding_dim), jnp.float32).at[n_id].set(x)
    assert jnp.allclose(jax.block_until_ready(emb2), ref2, atol=1e-6)

    # 8) stress the semaphore ring + multi-step grid (tiny G / ring)
    out_small_g = jax.block_until_ready(
        history_pull(hist.emb, n_id, rows_per_step=4, ring=2))
    assert jnp.allclose(out_small_g, ref_emb[n_id], atol=1e-6)

    emb3 = history_push(jnp.zeros((num_embeddings, embedding_dim), jnp.float32),
                        x, n_id=n_id, rows_per_step=4, ring=2)
    ref3 = jnp.zeros((num_embeddings, embedding_dim), jnp.float32).at[n_id].set(x)
    assert jnp.allclose(jax.block_until_ready(emb3), ref3, atol=1e-6)

    print("KERNEL_OK")
</pallas_src>

<mosaic_0001>
module attributes {stable_mosaic.version = 11 : i64} {
  func.func @_scatter_kernel(%arg0: i32, %arg1: memref<16xi32, #tpu.memory_space<smem>>, %arg2: memref<16x128xf32, #tpu.memory_space<any>>, %arg3: memref<64x128xf32, #tpu.memory_space<any>>, %arg4: memref<64x128xf32, #tpu.memory_space<any>>, %arg5: memref<32x!tpu.dma_semaphore, #tpu.memory_space<semaphore_mem>>) attributes {dimension_semantics = [#tpu.dimension_semantics<arbitrary>], iteration_bounds = array<i64: 1>, scalar_prefetch = 1 : i64, scratch_operands = 1 : i64, tpu.core_type = #tpu.core_type<tc>, window_params = [{}, {}, {}]} {
    %c512_i32 = arith.constant 512 : i32
    %0 = arith.muli %arg0, %c512_i32 : i32
    %c16_i32 = arith.constant 16 : i32
    %1 = arith.subi %c16_i32, %0 : i32
    %c512_i32_0 = arith.constant 512 : i32
    %2 = arith.minsi %1, %c512_i32_0 : i32
    %c0_i32 = arith.constant 0 : i32
    %c0_i32_1 = arith.constant 0 : i32
    %3 = arith.subi %2, %c0_i32_1 : i32
    %4 = arith.addi %c0_i32_1, %3 : i32
    %c1_i32 = arith.constant 1 : i32
    scf.for %arg6 = %c0_i32_1 to %4 step %c1_i32  : i32 {
      %c32_i32_5 = arith.constant 32 : i32
      %9 = arith.cmpi sge, %arg6, %c32_i32_5 : i32
      %10 = arith.extui %9 : i1 to i32
      %c0_i32_6 = arith.constant 0 : i32
      %11 = arith.cmpi ne, %10, %c0_i32_6 : i32
      scf.if %11 {
        %c32_i32_15 = arith.constant 32 : i32
        %29 = arith.subi %arg6, %c32_i32_15 : i32
        %30 = arith.addi %0, %29 : i32
        %31 = arith.index_cast %30 : i32 to index
        %32 = memref.load %arg1[%31] : memref<16xi32, #tpu.memory_space<smem>>
        %c32_i32_16 = arith.constant 32 : i32
        %c0_i32_17 = arith.constant 0 : i32
        %33 = arith.cmpi eq, %c32_i32_16, %c0_i32_17 : i32
        %c1_i32_18 = arith.constant 1 : i32
        %34 = arith.select %33, %c1_i32_18, %c32_i32_16 : i32
        %35 = arith.remsi %29, %34 : i32
        %c0_i32_19 = arith.constant 0 : i32
        %36 = arith.cmpi ne, %35, %c0_i32_19 : i32
        %c0_i32_20 = arith.constant 0 : i32
        %37 = arith.cmpi slt, %35, %c0_i32_20 : i32
        %c0_i32_21 = arith.constant 0 : i32
        %38 = arith.cmpi slt, %34, %c0_i32_21 : i32
        %39 = arith.xori %37, %38 : i1
        %40 = arith.andi %39, %36 : i1
        %41 = arith.addi %35, %34 : i32
        %42 = arith.select %40, %41, %35 : i32
        %c0_i32_22 = arith.constant 0 : i32
        %43 = tpu.memref_slice %arg2[%30, %c0_i32_22] : memref<16x128xf32, #tpu.memory_space<any>> -> memref<1x128xf32, #tpu.memory_space<any>>
        %c0_i32_23 = arith.constant 0 : i32
        %44 = tpu.memref_slice %arg4[%32, %c0_i32_23] : memref<64x128xf32, #tpu.memory_space<any>> -> memref<1x128xf32, #tpu.memory_space<any>>
        %45 = tpu.memref_slice %arg5[%42] : memref<32x!tpu.dma_semaphore, #tpu.memory_space<semaphore_mem>> -> memref<1x!tpu.dma_semaphore, #tpu.memory_space<semaphore_mem>>
        %46 = tpu.memref_squeeze %45 : memref<1x!tpu.dma_semaphore, #tpu.memory_space<semaphore_mem>> -> memref<!tpu.dma_semaphore, #tpu.memory_space<semaphore_mem>>
        tpu.wait_dma2 semaphore(%46 : memref<!tpu.dma_semaphore, #tpu.memory_space<semaphore_mem>>) src(%43 : memref<1x128xf32, #tpu.memory_space<any>>) dst(%44 : memref<1x128xf32, #tpu.memory_space<any>>)
      } else {
      }
      %12 = arith.addi %0, %arg6 : i32
      %13 = arith.index_cast %12 : i32 to index
      %14 = memref.load %arg1[%13] : memref<16xi32, #tpu.memory_space<smem>>
      %c32_i32_7 = arith.constant 32 : i32
      %c0_i32_8 = arith.constant 0 : i32
      %15 = arith.cmpi eq, %c32_i32_7, %c0_i32_8 : i32
      %c1_i32_9 = arith.constant 1 : i32
      %16 = arith.select %15, %c1_i32_9, %c32_i32_7 : i32
      %17 = arith.remsi %arg6, %16 : i32
      %c0_i32_10 = arith.constant 0 : i32
      %18 = arith.cmpi ne, %17, %c0_i32_10 : i32
      %c0_i32_11 = arith.constant 0 : i32
      %19 = arith.cmpi slt, %17, %c0_i32_11 : i32
      %c0_i32_12 = arith.constant 0 : i32
      %20 = arith.cmpi slt, %16, %c0_i32_12 : i32
      %21 = arith.xori %19, %20 : i1
      %22 = arith.andi %21, %18 : i1
      %23 = arith.addi %17, %16 : i32
      %24 = arith.select %22, %23, %17 : i32
      %c0_i32_13 = arith.constant 0 : i32
      %25 = tpu.memref_slice %arg2[%12, %c0_i32_13] : memref<16x128xf32, #tpu.memory_space<any>> -> memref<1x128xf32, #tpu.memory_space<any>>
      %c0_i32_14 = arith.constant 0 : i32
      %26 = tpu.memref_slice %arg4[%14, %c0_i32_14] : memref<64x128xf32, #tpu.memory_space<any>> -> memref<1x128xf32, #tpu.memory_space<any>>
      %27 = tpu.memref_slice %arg5[%24] : memref<32x!tpu.dma_semaphore, #tpu.memory_space<semaphore_mem>> -> memref<1x!tpu.dma_semaphore, #tpu.memory_space<semaphore_mem>>
      %28 = tpu.memref_squeeze %27 : memref<1x!tpu.dma_semaphore, #tpu.memory_space<semaphore_mem>> -> memref<!tpu.dma_semaphore, #tpu.memory_space<semaphore_mem>>
      tpu.enqueue_dma source(%25 : memref<1x128xf32, #tpu.memory_space<any>>) target(%26 : memref<1x128xf32, #tpu.memory_space<any>>) target_semaphore(%28 : memref<!tpu.dma_semaphore, #tpu.memory_space<semaphore_mem>>)
    }
    %c32_i32 = arith.constant 32 : i32
    %5 = arith.subi %2, %c32_i32 : i32
    %c0_i32_2 = arith.constant 0 : i32
    %6 = arith.maxsi %5, %c0_i32_2 : i32
    %c0_i32_3 = arith.constant 0 : i32
    %7 = arith.subi %2, %6 : i32
    %8 = arith.addi %6, %7 : i32
    %c1_i32_4 = arith.constant 1 : i32
    scf.for %arg6 = %6 to %8 step %c1_i32_4  : i32 {
      %9 = arith.addi %0, %arg6 : i32
      %10 = arith.index_cast %9 : i32 to index
      %11 = memref.load %arg1[%10] : memref<16xi32, #tpu.memory_space<smem>>
      %c32_i32_5 = arith.constant 32 : i32
      %c0_i32_6 = arith.constant 0 : i32
      %12 = arith.cmpi eq, %c32_i32_5, %c0_i32_6 : i32
      %c1_i32_7 = arith.constant 1 : i32
      %13 = arith.select %12, %c1_i32_7, %c32_i32_5 : i32
      %14 = arith.remsi %arg6, %13 : i32
      %c0_i32_8 = arith.constant 0 : i32
      %15 = arith.cmpi ne, %14, %c0_i32_8 : i32
      %c0_i32_9 = arith.constant 0 : i32
      %16 = arith.cmpi slt, %14, %c0_i32_9 : i32
      %c0_i32_10 = arith.constant 0 : i32
      %17 = arith.cmpi slt, %13, %c0_i32_10 : i32
      %18 = arith.xori %16, %17 : i1
      %19 = arith.andi %18, %15 : i1
      %20 = arith.addi %14, %13 : i32
      %21 = arith.select %19, %20, %14 : i32
      %c0_i32_11 = arith.constant 0 : i32
      %22 = tpu.memref_slice %arg2[%9, %c0_i32_11] : memref<16x128xf32, #tpu.memory_space<any>> -> memref<1x128xf32, #tpu.memory_space<any>>
      %c0_i32_12 = arith.constant 0 : i32
      %23 = tpu.memref_slice %arg4[%11, %c0_i32_12] : memref<64x128xf32, #tpu.memory_space<any>> -> memref<1x128xf32, #tpu.memory_space<any>>
      %24 = tpu.memref_slice %arg5[%21] : memref<32x!tpu.dma_semaphore, #tpu.memory_space<semaphore_mem>> -> memref<1x!tpu.dma_semaphore, #tpu.memory_space<semaphore_mem>>
      %25 = tpu.memref_squeeze %24 : memref<1x!tpu.dma_semaphore, #tpu.memory_space<semaphore_mem>> -> memref<!tpu.dma_semaphore, #tpu.memory_space<semaphore_mem>>
      tpu.wait_dma2 semaphore(%25 : memref<!tpu.dma_semaphore, #tpu.memory_space<semaphore_mem>>) src(%22 : memref<1x128xf32, #tpu.memory_space<any>>) dst(%23 : memref<1x128xf32, #tpu.memory_space<any>>)
    }
    return
  }
}

</mosaic_0001>

<llo_original>
// kernel: _scatter_push_impl.1
$region0: #{_scatter_push_impl.1}
  #allocation0 [shape = 'u32[]', space=smem, size = 0x4, offset = 0x4, fixed_abs, tag = 'smem constant byte address 0x4 - core index']
  #allocation1 [shape = 'u32[144,128]{1,0:T(1,128)}', space=vmem, size = 0x12000, scoped, tag = 'internal scratch']
  #allocation2 [shape = 's32[32]{0}', space=sflag, size = 0x80, scoped, tag = 'scratch operand']
  #allocation3 [shape = 's32[1]{0}', space=sflag, size = 0x4, scoped, tag = 'scoped memory for _scatter_push_impl.1']
  #allocation4 [shape = 'u8[512]{0}', space=smem, size = 0x200, scoped, tag = 'prefetched SMEM operand 0']
  #allocation5 [shape = 's32[]', space=sflag, size = 0x4, offset = 0, fixed_abs, tag = 'sflag constant byte address 0x0 - dummy sync flag']
  #allocation6 [shape = 'u32[0]{0}', space=smem, size = 0, offset = 0, fixed_abs, tag = 'smem constant byte address 0x0 - null']
  %s0 = inlined_call_operand.vmem [shape: s32[16], index: 0, kind: input, shape index: {}]
  %s1 = inlined_call_operand.hbm [shape: f32[16,128], index: 1, kind: input, shape index: {}]
  %s2 = inlined_call_operand.hbm [shape: f32[64,128], index: 2, kind: input, shape index: {}, may-alias: {2,3}]
  %s3 = inlined_call_operand.hbm [shape: f32[64,128], index: 3, kind: output, shape index: {}, may-alias: {2,3}]
  %s4 = sld [smem:[#allocation0]]
  $region20: #{_scatter_push_impl.1} parent=0
    _
  %s6 = ssub.s32 1, %s4
  %s7 = scalar_select 0, %s6, %s4
  %s8 = sshll.u32 %s0, 4
  %s9 = int_to_ptr.vmem [resolvable:$true] %s8
  %11 = dma.vmem_to_smem %s9, 16, [#allocation4], [#allocation3]
  %12 = dma.done [#allocation3], 16
  %13 = sfence
  %s14 = smul.u32 0, 512
  %s15 = ssub.s32 16, %s14
  %p16 = scmp.lt.s32.totalorder %s15, 512
  %s17 = scalar_select %p16, %s15, 512
  // While loop
  $region2: #{_scatter_push_impl.1} parent=0 // loop_pre_header
    _
  $region3: #{_scatter_push_impl.1} parent=0 // loop_header
    %s19 = sphi 0, %s21
    %p20 = scmp.ge.s32.totalorder %s19, %s17
  $region4: #{_scatter_push_impl.1} parent=0 // loop_header_branch
    %23 = sbr.rel (%p20) target = $region8
  $region5: #{_scatter_push_impl.1} parent=0 // loop_body
    %p24 = scmp.ge.s32.totalorder %s19, 32
    // Predicated region
    $region9: #{_scatter_push_impl.1} parent=5 // pred_check
      %p25 = pneg %p24
    $region10: #{_scatter_push_impl.1} parent=5 // pred_check_branch
      %27 = sbr.rel (%p25) target = $region12
    $region11: #{_scatter_push_impl.1} parent=5 // pred_region
      %s28 = ssub.s32 %s19, 32
      %s29 = sadd.s32 %s14, %s28
      %s30 = sld [smem:[#allocation4 + %s29]]
      %p31 = scmp.lt.s32.totalorder %s28, 0
      %s32 = ssub.s32 0, %s28
      %s33 = scalar_select %p31, %s32, %s28
      %s34 = sand.u32 %s33, 31
      %s35 = ssub.s32 0, %s34
      %s36 = scalar_select %p31, %s35, %s34
      %p37 = scmp.ne.s32.totalorder %s36, 0
      %p38 = scmp.lt.s32.totalorder %s36, 0
      %p39 = pnand %p38, %p37
      %p40 = pneg %p39
      %s41 = sadd.s32 %s36, 32
      %s42 = scalar_select %p40, %s41, %s36
      %s43 = scalar_lea.sflag [#allocation2], %s42
      %s44 = smul.u32 1, 1
      %s45 = sshll.u32 %s44, 4
      %46 = dma.done %s43, %s45
    $region12: #{_scatter_push_impl.1} parent=5 // pred_fallthru
      _
    %s47 = sadd.s32 %s14, %s19
    %s48 = sld [smem:[#allocation4 + %s47]]
    %p49 = scmp.lt.s32.totalorder %s19, 0
    %s50 = ssub.s32 0, %s19
    %s51 = scalar_select %p49, %s50, %s19
    %s52 = sand.u32 %s51, 31
    %s53 = ssub.s32 0, %s52
    %s54 = scalar_select %p49, %s53, %s52
    %p55 = scmp.ne.s32.totalorder %s54, 0
    %p56 = scmp.lt.s32.totalorder %s54, 0
    %p57 = pnand %p56, %p55
    %p58 = pneg %p57
    %s59 = sadd.s32 %s54, 32
    %s60 = scalar_select %p58, %s59, %s54
    %s61 = smul.addr %s47, 16
    %s62 = scalar_lea.hbm %s1, %s61
    %s63 = smul.addr %s48, 16
    %s64 = scalar_lea.hbm %s3, %s63
    %s65 = scalar_lea.sflag [#allocation2], %s60
    %s67 = sshll.u32 1, 14
    %s68 = sxor.u32 4294967295, %s67
    %72 = dma.general %s62, 16, %s64, %s65, 131072, [#allocation6], 0, 0
  $region6: #{_scatter_push_impl.1} parent=0 // loop_footer
    %s21 = sadd.s32 %s19, 1
  $region7: #{_scatter_push_impl.1} parent=0 // loop_footer_branch
    %18 = sbr.rel target = $region3
  $region8: #{_scatter_push_impl.1} parent=0 // loop_exit
    _
  %s73 = ssub.s32 %s17, 32
  %p74 = scmp.gt.s32.totalorder %s73, 0
  %s75 = scalar_select %p74, %s73, 0
  // While loop
  $region13: #{_scatter_push_impl.1} parent=0 // loop_pre_header
    _
  $region14: #{_scatter_push_impl.1} parent=0 // loop_header
    %s77 = sphi %s75, %s79
    %p78 = scmp.ge.s32.totalorder %s77, %s17
  $region15: #{_scatter_push_impl.1} parent=0 // loop_header_branch
    %81 = sbr.rel (%p78) target = $region19
  $region16: #{_scatter_push_impl.1} parent=0 // loop_body
    %s82 = sadd.s32 %s14, %s77
    %s83 = sld [smem:[#allocation4 + %s82]]
    %p84 = scmp.lt.s32.totalorder %s77, 0
    %s85 = ssub.s32 0, %s77
    %s86 = scalar_select %p84, %s85, %s77
    %s87 = sand.u32 %s86, 31
    %s88 = ssub.s32 0, %s87
    %s89 = scalar_select %p84, %s88, %s87
    %p90 = scmp.ne.s32.totalorder %s89, 0
    %p91 = scmp.lt.s32.totalorder %s89, 0
    %p92 = pnand %p91, %p90
    %p93 = pneg %p92
    %s94 = sadd.s32 %s89, 32
    %s95 = scalar_select %p93, %s94, %s89
    %s96 = scalar_lea.sflag [#allocation2], %s95
    %s97 = smul.u32 1, 1
    %s98 = sshll.u32 %s97, 4
    %99 = dma.done %s96, %s98
  $region17: #{_scatter_push_impl.1} parent=0 // loop_footer
    %s79 = sadd.s32 %s77, 1
  $region18: #{_scatter_push_impl.1} parent=0 // loop_footer_branch
    %76 = sbr.rel target = $region14
  $region19: #{_scatter_push_impl.1} parent=0 // loop_exit
    _
  %100 = vsyncmov [#allocation2]
  %s101 = vpop.sfrf %100
  %p102 = scmp.eq.s32.totalorder %s101, 0
  %p103 = pneg %p102
  %105 = shalt.err (%p103)
  %s106 = scalar_lea.sflag [#allocation2], 1
  %107 = vsyncmov %s106
  %s108 = vpop.sfrf %107
  %p109 = scmp.eq.s32.totalorder %s108, 0
  %p110 = pneg %p109
  %112 = shalt.err (%p110)
  %s113 = scalar_lea.sflag [#allocation2], 2
  %114 = vsyncmov %s113
  %s115 = vpop.sfrf %114
  %p116 = scmp.eq.s32.totalorder %s115, 0
  %p117 = pneg %p116
  %119 = shalt.err (%p117)
  %s120 = scalar_lea.sflag [#allocation2], 3
  %121 = vsyncmov %s120
  %s122 = vpop.sfrf %121
  %p123 = scmp.eq.s32.totalorder %s122, 0
  %p124 = pneg %p123
  %126 = shalt.err (%p124)
  %s127 = scalar_lea.sflag [#allocation2], 4
  %128 = vsyncmov %s127
  %s129 = vpop.sfrf %128
  %p130 = scmp.eq.s32.totalorder %s129, 0
  %p131 = pneg %p130
  %133 = shalt.err (%p131)
  %s134 = scalar_lea.sflag [#allocation2], 5
  %135 = vsyncmov %s134
  %s136 = vpop.sfrf %135
  %p137 = scmp.eq.s32.totalorder %s136, 0
  %p138 = pneg %p137
  %140 = shalt.err (%p138)
  %s141 = scalar_lea.sflag [#allocation2], 6
  %142 = vsyncmov %s141
  %s143 = vpop.sfrf %142
  %p144 = scmp.eq.s32.totalorder %s143, 0
  %p145 = pneg %p144
  %147 = shalt.err (%p145)
  %s148 = scalar_lea.sflag [#allocation2], 7
  %149 = vsyncmov %s148
  %s150 = vpop.sfrf %149
  %p151 = scmp.eq.s32.totalorder %s150, 0
  %p152 = pneg %p151
  %154 = shalt.err (%p152)
  %s155 = scalar_lea.sflag [#allocation2], 8
  %156 = vsyncmov %s155
  %s157 = vpop.sfrf %156
  %p158 = scmp.eq.s32.totalorder %s157, 0
  %p159 = pneg %p158
  %161 = shalt.err (%p159)
  %s162 = scalar_lea.sflag [#allocation2], 9
  %163 = vsyncmov %s162
  %s164 = vpop.sfrf %163
  %p165 = scmp.eq.s32.totalorder %s164, 0
  %p166 = pneg %p165
  %168 = shalt.err (%p166)
  %s169 = scalar_lea.sflag [#allocation2], 10
  %170 = vsyncmov %s169
  %s171 = vpop.sfrf %170
  %p172 = scmp.eq.s32.totalorder %s171, 0
  %p173 = pneg %p172
  %175 = shalt.err (%p173)
  %s176 = scalar_lea.sflag [#allocation2], 11
  %177 = vsyncmov %s176
  %s178 = vpop.sfrf %177
  %p179 = scmp.eq.s32.totalorder %s178, 0
  %p180 = pneg %p179
  %182 = shalt.err (%p180)
  %s183 = scalar_lea.sflag [#allocation2], 12
  %184 = vsyncmov %s183
  %s185 = vpop.sfrf %184
  %p186 = scmp.eq.s32.totalorder %s185, 0
  %p187 = pneg %p186
  %189 = shalt.err (%p187)
  %s190 = scalar_lea.sflag [#allocation2], 13
  %191 = vsyncmov %s190
  %s192 = vpop.sfrf %191
  %p193 = scmp.eq.s32.totalorder %s192, 0
  %p194 = pneg %p193
  %196 = shalt.err (%p194)
  %s197 = scalar_lea.sflag [#allocation2], 14
  %198 = vsyncmov %s197
  %s199 = vpop.sfrf %198
  %p200 = scmp.eq.s32.totalorder %s199, 0
  %p201 = pneg %p200
  %203 = shalt.err (%p201)
  %s204 = scalar_lea.sflag [#allocation2], 15
  %205 = vsyncmov %s204
  %s206 = vpop.sfrf %205
  %p207 = scmp.eq.s32.totalorder %s206, 0
  %p208 = pneg %p207
  %210 = shalt.err (%p208)
  %s211 = scalar_lea.sflag [#allocation2], 16
  %212 = vsyncmov %s211
  %s213 = vpop.sfrf %212
  %p214 = scmp.eq.s32.totalorder %s213, 0
  %p215 = pneg %p214
  %217 = shalt.err (%p215)
  %s218 = scalar_lea.sflag [#allocation2], 17
  %219 = vsyncmov %s218
  %s220 = vpop.sfrf %219
  %p221 = scmp.eq.s32.totalorder %s220, 0
  %p222 = pneg %p221
  %224 = shalt.err (%p222)
  %s225 = scalar_lea.sflag [#allocation2], 18
  %226 = vsyncmov %s225
  %s227 = vpop.sfrf %226
  %p228 = scmp.eq.s32.totalorder %s227, 0
  %p229 = pneg %p228
  %231 = shalt.err (%p229)
  %s232 = scalar_lea.sflag [#allocation2], 19
  %233 = vsyncmov %s232
  %s234 = vpop.sfrf %233
  %p235 = scmp.eq.s32.totalorder %s234, 0
  %p236 = pneg %p235
  %238 = shalt.err (%p236)
  %s239 = scalar_lea.sflag [#allocation2], 20
  %240 = vsyncmov %s239
  %s241 = vpop.sfrf %240
  %p242 = scmp.eq.s32.totalorder %s241, 0
  %p243 = pneg %p242
  %245 = shalt.err (%p243)
  %s246 = scalar_lea.sflag [#allocation2], 21
  %247 = vsyncmov %s246
  %s248 = vpop.sfrf %247
  %p249 = scmp.eq.s32.totalorder %s248, 0
  %p250 = pneg %p249
  %252 = shalt.err (%p250)
  %s253 = scalar_lea.sflag [#allocation2], 22
  %254 = vsyncmov %s253
  %s255 = vpop.sfrf %254
  %p256 = scmp.eq.s32.totalorder %s255, 0
  %p257 = pneg %p256
  %259 = shalt.err (%p257)
  %s260 = scalar_lea.sflag [#allocation2], 23
  %261 = vsyncmov %s260
  %s262 = vpop.sfrf %261
  %p263 = scmp.eq.s32.totalorder %s262, 0
  %p264 = pneg %p263
  %266 = shalt.err (%p264)
  %s267 = scalar_lea.sflag [#allocation2], 24
  %268 = vsyncmov %s267
  %s269 = vpop.sfrf %268
  %p270 = scmp.eq.s32.totalorder %s269, 0
  %p271 = pneg %p270
  %273 = shalt.err (%p271)
  %s274 = scalar_lea.sflag [#allocation2], 25
  %275 = vsyncmov %s274
  %s276 = vpop.sfrf %275
  %p277 = scmp.eq.s32.totalorder %s276, 0
  %p278 = pneg %p277
  %280 = shalt.err (%p278)
  %s281 = scalar_lea.sflag [#allocation2], 26
  %282 = vsyncmov %s281
  %s283 = vpop.sfrf %282
  %p284 = scmp.eq.s32.totalorder %s283, 0
  %p285 = pneg %p284
  %287 = shalt.err (%p285)
  %s288 = scalar_lea.sflag [#allocation2], 27
  %289 = vsyncmov %s288
  %s290 = vpop.sfrf %289
  %p291 = scmp.eq.s32.totalorder %s290, 0
  %p292 = pneg %p291
  %294 = shalt.err (%p292)
  %s295 = scalar_lea.sflag [#allocation2], 28
  %296 = vsyncmov %s295
  %s297 = vpop.sfrf %296
  %p298 = scmp.eq.s32.totalorder %s297, 0
  %p299 = pneg %p298
  %301 = shalt.err (%p299)
  %s302 = scalar_lea.sflag [#allocation2], 29
  %303 = vsyncmov %s302
  %s304 = vpop.sfrf %303
  %p305 = scmp.eq.s32.totalorder %s304, 0
  %p306 = pneg %p305
  %308 = shalt.err (%p306)
  %s309 = scalar_lea.sflag [#allocation2], 30
  %310 = vsyncmov %s309
  %s311 = vpop.sfrf %310
  %p312 = scmp.eq.s32.totalorder %s311, 0
  %p313 = pneg %p312
  %315 = shalt.err (%p313)
  %s316 = scalar_lea.sflag [#allocation2], 31
  %317 = vsyncmov %s316
  %s318 = vpop.sfrf %317
  %p319 = scmp.eq.s32.totalorder %s318, 0
  %p320 = pneg %p319
  %322 = shalt.err (%p320)

</llo_original>
